<compile_context>
chip_gen: v5e
topology: v5e:2x2
jax: 0.10.0
libtpu: 0.0.40
codegen_flags: <defaults>
</compile_context>

<pallas_src>
import jax
import jax.numpy as jnp
from jax.experimental import pallas as pl
from jax.experimental.pallas import tpu as pltpu


def _bridge_kernel(x_ref, w_ref, b_ref, o_ref):
    # Per grid step (one hidden state):
    #   x: (M, K), w: (K, N), b: (1, N)  ->  o = relu(x @ w + b)
    acc = jnp.dot(x_ref[...], w_ref[...], preferred_element_type=jnp.float32)
    acc = acc + b_ref[...]                       # broadcast (1, N) over rows
    o_ref[...] = jnp.maximum(acc, 0.0).astype(o_ref.dtype)


def _fused_linear_relu(x_stack, w_stack, b_stack):
    """relu(x @ w + b) for a stack of independent (x, w, b) triples.

    x_stack : (S, M, K)   w_stack : (S, K, N)   b_stack : (S, 1, N)
    Returns (S, M, N).  One pallas_call, grid over the state axis S
    (marked "parallel" so v7x can shard states across its 2 TensorCores).
    Blocks are full-array in the last two dims (tiny bridge shapes), which
    satisfies the TPU tiling rule.
    """
    S, M, K = x_stack.shape
    N = w_stack.shape[-1]
    itemsize = jnp.dtype(x_stack.dtype).itemsize
    bytes_accessed = (x_stack.size + w_stack.size + b_stack.size + S * M * N) * itemsize

    return pl.pallas_call(
        _bridge_kernel,
        out_shape=jax.ShapeDtypeStruct((S, M, N), x_stack.dtype),
        grid=(S,),
        in_specs=[
            pl.BlockSpec((None, M, K), lambda s: (s, 0, 0)),   # x   (state s)
            pl.BlockSpec((None, K, N), lambda s: (s, 0, 0)),   # w   (state s)
            pl.BlockSpec((None, 1, N), lambda s: (s, 0, 0)),   # b   (state s)
        ],
        out_specs=pl.BlockSpec((None, M, N), lambda s: (s, 0, 0)),
        compiler_params=pltpu.CompilerParams(
            dimension_semantics=("parallel",),                 # v7x: 1 state / TC
        ),
        cost_estimate=pl.CostEstimate(
            flops=2 * S * M * K * N,
            transcendentals=0,
            bytes_accessed=bytes_accessed,
        ),
    )(x_stack, w_stack, b_stack)


def bridge_forward(hidden, params, share_bidirectional_parameters=True):
    """JAX/Pallas port of Bridge.forward.

    hidden : tensor or tuple of tensors, each (batch_size, encoder_hidden_size)
    params : list of (W, b) pairs, one per hidden state.
             If sharing, W has shape (encoder_hidden_size // 2, out_dim),
             otherwise (encoder_hidden_size, out_dim).
    """
    single = not isinstance(hidden, tuple)
    if single:
        hidden = (hidden,)

    batch_size, hidden_size = hidden[0].shape
    num_states = len(hidden)

    # Flatten each state to a 2-D (rows, features) slab.  For the shared
    # bidirectional case this is the free row-major view (B, H) -> (B*2, H/2),
    # matching PyTorch .view semantics for concatenated direction states.
    if share_bidirectional_parameters:
        xs = [h.reshape(batch_size * 2, hidden_size // 2) for h in hidden]
    else:
        xs = list(hidden)

    # Stack states so the whole bridge is ONE kernel launch.
    x_stack = jnp.stack(xs, axis=0)                                   # (S, M, K)
    w_stack = jnp.stack([w for (w, _) in params], axis=0)             # (S, K, N)
    b_stack = jnp.stack([b.reshape(1, -1) for (_, b) in params], 0)   # (S, 1, N)

    y_stack = _fused_linear_relu(x_stack, w_stack, b_stack)           # (S, M, N)

    outputs = []
    for i in range(num_states):
        y = y_stack[i]
        if share_bidirectional_parameters:
            y = y.reshape(batch_size, -1)                             # (B, 2*N)
        outputs.append(y)

    output = tuple(outputs)
    if len(output) == 1:
        output = output[0]
    return output


def _ref_forward(hidden, params, share):
    """Plain-JAX reference for correctness checking."""
    single = not isinstance(hidden, tuple)
    if single:
        hidden = (hidden,)
    b_sz, h_sz = hidden[0].shape
    outs = []
    for (w, b), h in zip(params, hidden):
        if share:
            h = h.reshape(b_sz * 2, h_sz // 2)
        y = jnp.maximum(h @ w + b, 0.0)
        if share:
            y = y.reshape(b_sz, -1)
        outs.append(y)
    out = tuple(outs)
    return out[0] if len(out) == 1 else out


if __name__ == "__main__":
    # LSTM-style bridge: two hidden states (h, c), bidirectional encoder,
    # shared forward/backward parameters.
    batch_size = 2
    encoder_hidden_size = 32          # concat of two directions of size 16
    half = encoder_hidden_size // 2   # per-direction hidden size
    out_dim = 16                      # FeedForward output dim per direction
    num_states = 2                    # LSTM -> (h, c)

    key = jax.random.PRNGKey(0)
    keys = jax.random.split(key, 2 + 2 * num_states)

    # Inputs: tuple of (batch_size, encoder_hidden_size) tensors.
    hidden = tuple(
        jax.random.normal(keys[i], (batch_size, encoder_hidden_size),
                          dtype=jnp.float32)
        for i in range(num_states)
    )

    # Deterministic parameters: one Linear(half -> out_dim) per hidden state.
    params = []
    for i in range(num_states):
        w = jax.random.normal(keys[2 + 2 * i], (half, out_dim),
                              dtype=jnp.float32) * 0.1
        b = jax.random.normal(keys[3 + 2 * i], (out_dim,),
                              dtype=jnp.float32) * 0.1
        params.append((w, b))

    # --- Shared-bidirectional LSTM bridge (h, c) ---
    out = bridge_forward(hidden, params, share_bidirectional_parameters=True)
    out = jax.tree_util.tree_map(jax.block_until_ready, out)
    ref = _ref_forward(hidden, params, True)
    for o, r in zip(out, ref):
        assert o.shape == (batch_size, 2 * out_dim)
        assert jnp.allclose(o, r, atol=1e-5, rtol=1e-5)

    # --- GRU-style bridge: single state, no parameter sharing ---
    w1 = jax.random.normal(keys[0], (encoder_hidden_size, out_dim),
                           dtype=jnp.float32) * 0.1
    b1 = jax.random.normal(keys[1], (out_dim,), dtype=jnp.float32) * 0.1
    out1 = bridge_forward(hidden[0], [(w1, b1)],
                          share_bidirectional_parameters=False)
    out1 = jax.block_until_ready(out1)
    ref1 = _ref_forward(hidden[0], [(w1, b1)], False)
    assert out1.shape == (batch_size, out_dim)
    assert jnp.allclose(out1, ref1, atol=1e-5, rtol=1e-5)

    print("KERNEL_OK")
</pallas_src>

<mosaic_0001>
module attributes {stable_mosaic.version = 11 : i64} {
  func.func @_bridge_kernel(%arg0: i32, %arg1: memref<1x4x16xf32, #tpu.memory_space<vmem>>, %arg2: memref<1x16x16xf32, #tpu.memory_space<vmem>>, %arg3: memref<1x1x16xf32, #tpu.memory_space<vmem>>, %arg4: memref<1x4x16xf32, #tpu.memory_space<vmem>>) attributes {dimension_semantics = [#tpu.dimension_semantics<parallel>], iteration_bounds = array<i64: 2>, scalar_prefetch = 0 : i64, scratch_operands = 0 : i64, tpu.core_type = #tpu.core_type<tc>, window_params = [{transform_indices = @transform_0, window_bounds = array<i64: 1, 4, 16>}, {transform_indices = @transform_1, window_bounds = array<i64: 1, 16, 16>}, {transform_indices = @transform_2, window_bounds = array<i64: 1, 1, 16>}, {transform_indices = @transform_3, window_bounds = array<i64: 1, 4, 16>}]} {
    %c0 = arith.constant 0 : index
    %c0_0 = arith.constant 0 : index
    %c0_1 = arith.constant 0 : index
    %0 = vector.load %arg1[%c0, %c0_0, %c0_1] : memref<1x4x16xf32, #tpu.memory_space<vmem>>, vector<1x4x16xf32>
    %1 = vector.shape_cast %0 : vector<1x4x16xf32> to vector<4x16xf32>
    %c0_2 = arith.constant 0 : index
    %c0_3 = arith.constant 0 : index
    %c0_4 = arith.constant 0 : index
    %2 = vector.load %arg2[%c0_2, %c0_3, %c0_4] : memref<1x16x16xf32, #tpu.memory_space<vmem>>, vector<1x16x16xf32>
    %3 = vector.shape_cast %2 : vector<1x16x16xf32> to vector<16x16xf32>
    %cst = arith.constant dense<0.000000e+00> : vector<4x16xf32>
    %4 = tpu.matmul %1, %3, %cst {dimension_numbers = #tpu.dot_dimension_numbers<[1], [0], [0], [1], [0, 0, 1, 1], [], []>} : vector<4x16xf32>, vector<16x16xf32>, vector<4x16xf32> -> vector<4x16xf32>
    %c0_5 = arith.constant 0 : index
    %c0_6 = arith.constant 0 : index
    %c0_7 = arith.constant 0 : index
    %5 = vector.load %arg3[%c0_5, %c0_6, %c0_7] : memref<1x1x16xf32, #tpu.memory_space<vmem>>, vector<1x1x16xf32>
    %6 = vector.shape_cast %5 : vector<1x1x16xf32> to vector<1x16xf32>
    %7 = vector.broadcast %6 : vector<1x16xf32> to vector<4x16xf32>
    %8 = arith.addf %4, %7 : vector<4x16xf32>
    %cst_8 = arith.constant 0.000000e+00 : f32
    %9 = vector.broadcast %cst_8 : f32 to vector<4x16xf32>
    %10 = arith.maximumf %8, %9 : vector<4x16xf32>
    %c0_9 = arith.constant 0 : index
    %c0_10 = arith.constant 0 : index
    %c0_11 = arith.constant 0 : index
    %11 = vector.load %arg4[%c0_9, %c0_10, %c0_11] : memref<1x4x16xf32, #tpu.memory_space<vmem>>, vector<1x4x16xf32>
    %12 = vector.shape_cast %11 : vector<1x4x16xf32> to vector<4x16xf32>
    %13 = vector.shape_cast %10 : vector<4x16xf32> to vector<1x4x16xf32>
    tpu.vector_store %arg4[%c0_9, %c0_10, %c0_11], %13 {strides = array<i32>} : memref<1x4x16xf32, #tpu.memory_space<vmem>>, vector<1x4x16xf32>,
    return
  }
  func.func @transform_0(%arg0: i32) -> (i32, i32, i32) {
    %c0_i32 = arith.constant 0 : i32
    %c0_i32_0 = arith.constant 0 : i32
    %c0_i32_1 = arith.constant 0 : i32
    return %arg0, %c0_i32, %c0_i32_0 : i32, i32, i32
  }
  func.func @transform_1(%arg0: i32) -> (i32, i32, i32) {
    %c0_i32 = arith.constant 0 : i32
    %c0_i32_0 = arith.constant 0 : i32
    %c0_i32_1 = arith.constant 0 : i32
    return %arg0, %c0_i32, %c0_i32_0 : i32, i32, i32
  }
  func.func @transform_2(%arg0: i32) -> (i32, i32, i32) {
    %c0_i32 = arith.constant 0 : i32
    %c0_i32_0 = arith.constant 0 : i32
    %c0_i32_1 = arith.constant 0 : i32
    return %arg0, %c0_i32, %c0_i32_0 : i32, i32, i32
  }
  func.func @transform_3(%arg0: i32) -> (i32, i32, i32) {
    %c0_i32 = arith.constant 0 : i32
    %c0_i32_0 = arith.constant 0 : i32
    %c0_i32_1 = arith.constant 0 : i32
    return %arg0, %c0_i32, %c0_i32_0 : i32, i32, i32
  }
}

</mosaic_0001>

<llo_original>
// kernel: tpu_custom_call.1
$region0: #{tpu_custom_call.1}
  #allocation0 [shape = 'u32[]', space=smem, size = 0x4, offset = 0x4, fixed_abs, tag = 'smem constant byte address 0x4 - core index']
  #allocation1 [shape = 'u32[72,128]{1,0:T(1,128)}', space=vmem, size = 0x9000, scoped, tag = 'internal scratch']
  %s0 = inlined_call_operand.hbm [shape: f32[2,4,16], index: 0, kind: input, shape index: {}]
  %s1 = inlined_call_operand.hbm [shape: f32[2,16,16], index: 1, kind: input, shape index: {}]
  %s2 = inlined_call_operand.hbm [shape: f32[2,1,16], index: 2, kind: input, shape index: {}]
  %s3 = inlined_call_operand.hbm [shape: f32[2,4,16], index: 3, kind: output, shape index: {}]
  %s4 = sld [smem:[#allocation0]]
  $region57: #{tpu_custom_call.1} parent=0
    _
  %s6 = ssub.s32 1, %s4
  %s7 = scalar_select 0, %s6, %s4
  $region1: #{tpu_custom_call.1} parent=0
    #allocation2 [shape = 'u8[4096]{0}', space=vmem, size = 0x1000, scoped, tag = 'input window, operand 0']
    #allocation3 [shape = 's32[2]{0}', space=sflag, size = 0x8, scoped, tag = 'scoped memory for tpu_custom_call.1']
    #allocation4 [shape = 's32[2]{0}', space=sflag, size = 0x8, scoped, tag = 'scoped memory for tpu_custom_call.1']
    #allocation5 [shape = 'u8[16384]{0}', space=vmem, size = 0x4000, scoped, tag = 'input window, operand 1']
    #allocation6 [shape = 's32[2]{0}', space=sflag, size = 0x8, scoped, tag = 'scoped memory for tpu_custom_call.1']
    #allocation7 [shape = 'u8[1024]{0}', space=vmem, size = 0x400, scoped, tag = 'input window, operand 2']
    #allocation8 [shape = 'u8[4096]{0}', space=vmem, size = 0x1000, scoped, tag = 'output window, operand 0']
    %8 = vsyncpa [#allocation3], 0
    %s9 = scalar_lea.sflag [#allocation3], 1
    %10 = vsyncpa %s9, 0
    %11 = vsyncpa [#allocation6], 0
    %s12 = scalar_lea.sflag [#allocation6], 1
    %13 = vsyncpa %s12, 0
    %14 = vsyncpa [#allocation4], 0
    %s15 = scalar_lea.sflag [#allocation4], 1
    %16 = vsyncpa %s15, 0
    loop: start=0, step=1, limit=4
    $region2: #{tpu_custom_call.1} parent=1 // loop_pre_header
      _
    $region3: #{tpu_custom_call.1} parent=1 // loop_header
      %s18 = sphi 0, %s22
      %p19 = scmp.ge.s32.totalorder %s18, 4
      %s28 = sphi 0, %s30
      %s31 = sphi 0, %s28
      %s32 = sphi 0, %s31
      %s48 = sphi 0, %s32
      %s54 = sphi 0, %s56
      %s57 = sphi 0, %s54
      %s58 = sphi 0, %s57
      %s74 = sphi 0, %s58
      %s80 = sphi 0, %s82
      %s83 = sphi 0, %s80
      %s84 = sphi 0, %s83
      %s100 = sphi 0, %s84
      %s106 = sphi 0, %s108
      %s109 = sphi 0, %s106
      %s110 = sphi 0, %s109
      %s126 = sphi 0, %s110
    $region4: #{tpu_custom_call.1} parent=1 // loop_header_branch
      %21 = sbr.rel (%p19) target = $region8
    $region5: #{tpu_custom_call.1} parent=1 // loop_body
      %s23 = ssub.s32 %s18, 1
      %s24 = ssub.s32 %s18, 2
      %s25 = sadd.s32 %s18, 1
      %s26 = ssub.s32 %s18, %s25
      %p27 = scmp.eq.s32.totalorder %s26, 0
      %s29 = sadd.s32 %s28, 1
      %s30 = scalar_select %p27, %s28, %s29
      %p33 = pneg %p27
      %p34 = scmp.eq.s32.totalorder %s18, 1
      %p35 = por %p33, %p34
      %p36 = scmp.ne.s32.totalorder %s28, %s31
      %p37 = scmp.eq.s32.totalorder %s18, 0
      %p38 = por %p36, %p37
      %p39 = scmp.ne.s32.totalorder %s28, %s31
      %p40 = scmp.eq.s32.totalorder %s23, 1
      %p41 = por %p39, %p40
      %p42 = scmp.ne.s32.totalorder %s31, %s32
      %p43 = scmp.eq.s32.totalorder %s23, 0
      %p44 = por %p42, %p43
      %p45 = scmp.ne.s32.totalorder %s31, %s32
      %p46 = scmp.eq.s32.totalorder %s24, 1
      %p47 = por %p45, %p46
      %p49 = scmp.ne.s32.totalorder %s32, %s48
      %p50 = scmp.eq.s32.totalorder %s24, 0
      %p51 = por %p49, %p50
      %s52 = ssub.s32 %s18, %s25
      %p53 = scmp.eq.s32.totalorder %s52, 0
      %s55 = sadd.s32 %s54, 1
      %s56 = scalar_select %p53, %s54, %s55
      %p59 = pneg %p53
      %p60 = scmp.eq.s32.totalorder %s18, 1
      %p61 = por %p59, %p60
      %p62 = scmp.ne.s32.totalorder %s54, %s57
      %p63 = scmp.eq.s32.totalorder %s18, 0
      %p64 = por %p62, %p63
      %p65 = scmp.ne.s32.totalorder %s54, %s57
      %p66 = scmp.eq.s32.totalorder %s23, 1
      %p67 = por %p65, %p66
      %p68 = scmp.ne.s32.totalorder %s57, %s58
      %p69 = scmp.eq.s32.totalorder %s23, 0
      %p70 = por %p68, %p69
      %p71 = scmp.ne.s32.totalorder %s57, %s58
      %p72 = scmp.eq.s32.totalorder %s24, 1
      %p73 = por %p71, %p72
      %p75 = scmp.ne.s32.totalorder %s58, %s74
      %p76 = scmp.eq.s32.totalorder %s24, 0
      %p77 = por %p75, %p76
      %s78 = ssub.s32 %s18, %s25
      %p79 = scmp.eq.s32.totalorder %s78, 0
      %s81 = sadd.s32 %s80, 1
      %s82 = scalar_select %p79, %s80, %s81
      %p85 = pneg %p79
      %p86 = scmp.eq.s32.totalorder %s18, 1
      %p87 = por %p85, %p86
      %p88 = scmp.ne.s32.totalorder %s80, %s83
      %p89 = scmp.eq.s32.totalorder %s18, 0
      %p90 = por %p88, %p89
      %p91 = scmp.ne.s32.totalorder %s80, %s83
      %p92 = scmp.eq.s32.totalorder %s23, 1
      %p93 = por %p91, %p92
      %p94 = scmp.ne.s32.totalorder %s83, %s84
      %p95 = scmp.eq.s32.totalorder %s23, 0
      %p96 = por %p94, %p95
      %p97 = scmp.ne.s32.totalorder %s83, %s84
      %p98 = scmp.eq.s32.totalorder %s24, 1
      %p99 = por %p97, %p98
      %p101 = scmp.ne.s32.totalorder %s84, %s100
      %p102 = scmp.eq.s32.totalorder %s24, 0
      %p103 = por %p101, %p102
      %s104 = ssub.s32 %s18, %s25
      %p105 = scmp.eq.s32.totalorder %s104, 0
      %s107 = sadd.s32 %s106, 1
      %s108 = scalar_select %p105, %s106, %s107
      %p111 = pneg %p105
      %p112 = scmp.eq.s32.totalorder %s18, 1
      %p113 = por %p111, %p112
      %p114 = scmp.ne.s32.totalorder %s106, %s109
      %p115 = scmp.eq.s32.totalorder %s18, 0
      %p116 = por %p114, %p115
      %p117 = scmp.ne.s32.totalorder %s106, %s109
      %p118 = scmp.eq.s32.totalorder %s23, 1
      %p119 = por %p117, %p118
      %p120 = scmp.ne.s32.totalorder %s109, %s110
      %p121 = scmp.eq.s32.totalorder %s23, 0
      %p122 = por %p120, %p121
      %p123 = scmp.ne.s32.totalorder %s109, %s110
      %p124 = scmp.eq.s32.totalorder %s24, 1
      %p125 = por %p123, %p124
      %p127 = scmp.ne.s32.totalorder %s110, %s126
      %p128 = scmp.eq.s32.totalorder %s24, 0
      %p129 = por %p127, %p128
      %p130 = scmp.le.s32.totalorder 1, %s18
      %p131 = scmp.lt.s32.totalorder %s18, 3
      %p132 = pnand %p130, %p131
      %p133 = pneg %p132
      // Predicated region
      $region9: #{tpu_custom_call.1} parent=5 // pred_check
        _
      $region10: #{tpu_custom_call.1} parent=5 // pred_check_branch
        %135 = sbr.rel (%p132) target = $region12
      $region11: #{tpu_custom_call.1} parent=5 // pred_region
        %s136 = ssub.s32 %s18, 1
      $region12: #{tpu_custom_call.1} parent=5 // pred_fallthru
        _
      %p137 = scmp.lt.s32.totalorder %s18, 2
      // Predicated region
      $region13: #{tpu_custom_call.1} parent=5 // pred_check
        %p138 = pneg %p137
      $region14: #{tpu_custom_call.1} parent=5 // pred_check_branch
        %140 = sbr.rel (%p138) target = $region16
      $region15: #{tpu_custom_call.1} parent=5 // pred_region
        // Predicated region
        $region17: #{tpu_custom_call.1} parent=15 // pred_check
          %p141 = pneg %p38
        $region18: #{tpu_custom_call.1} parent=15 // pred_check_branch
          %143 = sbr.rel (%p141) target = $region20
        $region19: #{tpu_custom_call.1} parent=15 // pred_region
          %s144 = sand.u32 %s28, 1
          %s145 = scalar_lea.sflag [#allocation3], %s144
          %s146 = sand.u32 %s28, 1
          %s147 = smul.addr %s146, 4
          %s148 = scalar_lea.vmem [#allocation2], %s147
          %150 = vsyncadd %s145, 0
          %s151 = smul.addr %s18, 4
          %s152 = scalar_lea.hbm %s0, %s151
          %s154 = sshll.u32 %s152, 4
          %s155 = int_to_ptr.hbm [resolvable:$true] %s154
          %s156 = sshll.u32 %s148, 4
          %s157 = int_to_ptr.vmem [resolvable:$true] %s156
          %159 = dma.hbm_to_vmem [thread:$0]  %s155, 64, %s157, %s145
        $region20: #{tpu_custom_call.1} parent=15 // pred_fallthru
          _
        // Predicated region
        $region21: #{tpu_custom_call.1} parent=15 // pred_check
          %p160 = pneg %p64
        $region22: #{tpu_custom_call.1} parent=15 // pred_check_branch
          %162 = sbr.rel (%p160) target = $region24
        $region23: #{tpu_custom_call.1} parent=15 // pred_region
          %s163 = sand.u32 %s18, 1
          %s164 = scalar_lea.sflag [#allocation6], %s163
          %s165 = sand.u32 %s54, 1
          %s166 = smul.addr %s165, 16
          %s167 = scalar_lea.vmem [#allocation5], %s166
          %169 = vsyncadd %s164, 0
          %s170 = smul.addr %s18, 2
          %s171 = smul.addr %s170, 8
          %s172 = scalar_lea.hbm %s1, %s171
          %s173 = sshll.u32 %s172, 4
          %s174 = int_to_ptr.hbm [resolvable:$true] %s173
          %s175 = sshll.u32 %s167, 4
          %s176 = int_to_ptr.vmem [resolvable:$true] %s175
          %181 = dma.hbm_to_vmem [thread:$0]  %s174, 256, %s176, %s164, 128, 128, 8
        $region24: #{tpu_custom_call.1} parent=15 // pred_fallthru
          _
        // Predicated region
        $region25: #{tpu_custom_call.1} parent=15 // pred_check
          %p182 = pneg %p90
        $region26: #{tpu_custom_call.1} parent=15 // pred_check_branch
          %184 = sbr.rel (%p182) target = $region28
        $region27: #{tpu_custom_call.1} parent=15 // pred_region
          %s185 = sand.u32 %s18, 1
          %s186 = scalar_lea.sflag [#allocation6], %s185
          %s187 = sand.u32 %s80, 1
          %s188 = scalar_lea.vmem [#allocation7], %s187
          %190 = vsyncadd %s186, 0
          %s191 = scalar_lea.hbm %s2, %s18
          %s193 = sshll.u32 %s191, 4
          %s194 = int_to_ptr.hbm [resolvable:$true] %s193
          %s195 = sshll.u32 %s188, 4
          %s196 = int_to_ptr.vmem [resolvable:$true] %s195
          %198 = dma.hbm_to_vmem [thread:$0]  %s194, 16, %s196, %s186
        $region28: #{tpu_custom_call.1} parent=15 // pred_fallthru
          _
      $region16: #{tpu_custom_call.1} parent=5 // pred_fallthru
        _
      %p199 = scmp.le.s32.totalorder 1, %s18
      %p200 = scmp.lt.s32.totalorder %s18, 3
      %p201 = pnand %p199, %p200
      %p202 = pneg %p201
      // Predicated region
      $region29: #{tpu_custom_call.1} parent=5 // pred_check
        _
      $region30: #{tpu_custom_call.1} parent=5 // pred_check_branch
        %204 = sbr.rel (%p201) target = $region32
      $region31: #{tpu_custom_call.1} parent=5 // pred_region
        %s205 = ssub.s32 %s18, 1
        %s206 = sand.u32 %s31, 1
        %s207 = scalar_lea.sflag [#allocation3], %s206
        %s208 = sand.u32 %s31, 1
        %s209 = smul.addr %s208, 4
        %s210 = scalar_lea.vmem [#allocation2], %s209
        // Predicated region
        $region33: #{tpu_custom_call.1} parent=31 // pred_check
          %p211 = pneg %p44
        $region34: #{tpu_custom_call.1} parent=31 // pred_check_branch
          %213 = sbr.rel (%p211) target = $region36
        $region35: #{tpu_custom_call.1} parent=31 // pred_region
          %215 = dma.done %s207, 64
        $region36: #{tpu_custom_call.1} parent=31 // pred_fallthru
          _
        %s216 = sand.u32 %s23, 1
        %s217 = scalar_lea.sflag [#allocation6], %s216
        %s218 = sand.u32 %s57, 1
        %s219 = smul.addr %s218, 16
        %s220 = scalar_lea.vmem [#allocation5], %s219
        // Predicated region
        $region37: #{tpu_custom_call.1} parent=31 // pred_check
          %p221 = pneg %p70
        $region38: #{tpu_custom_call.1} parent=31 // pred_check_branch
          %223 = sbr.rel (%p221) target = $region40
        $region39: #{tpu_custom_call.1} parent=31 // pred_region
          %225 = dma.done %s217, 256
        $region40: #{tpu_custom_call.1} parent=31 // pred_fallthru
          _
        %s226 = sand.u32 %s23, 1
        %s227 = scalar_lea.sflag [#allocation6], %s226
        %s228 = sand.u32 %s83, 1
        %s229 = scalar_lea.vmem [#allocation7], %s228
        // Predicated region
        $region41: #{tpu_custom_call.1} parent=31 // pred_check
          %p230 = pneg %p96
        $region42: #{tpu_custom_call.1} parent=31 // pred_check_branch
          %232 = sbr.rel (%p230) target = $region44
        $region43: #{tpu_custom_call.1} parent=31 // pred_region
          %234 = dma.done %s227, 16
        $region44: #{tpu_custom_call.1} parent=31 // pred_fallthru
          _
        %s235 = sand.u32 %s31, 1
        %s236 = scalar_lea.sflag [#allocation3], %s235
        %s237 = sand.u32 %s31, 1
        %s238 = smul.addr %s237, 4
        %s239 = scalar_lea.vmem [#allocation2], %s238
        %p240 = pneg %p44
        %p241 = pneg %p41
        %s242 = sand.u32 %s23, 1
        %s243 = scalar_lea.sflag [#allocation6], %s242
        %s244 = sand.u32 %s57, 1
        %s245 = smul.addr %s244, 16
        %s246 = scalar_lea.vmem [#allocation5], %s245
        %p247 = pneg %p70
        %p248 = pneg %p67
        %s249 = sand.u32 %s23, 1
        %s250 = scalar_lea.sflag [#allocation6], %s249
        %s251 = sand.u32 %s83, 1
        %s252 = scalar_lea.vmem [#allocation7], %s251
        %p253 = pneg %p96
        %p254 = pneg %p93
        %p255 = pneg %p122
        %p256 = pneg %p119
        %s257 = sand.u32 %s109, 1
        %s258 = scalar_lea.sflag [#allocation4], %s257
        %s259 = sand.u32 %s109, 1
        %s260 = smul.addr %s259, 4
        %s261 = scalar_lea.vmem [#allocation8], %s260
        %v262 = vld [vmem:[%s210] sm:$0xf]
        %v263 = vld [vmem:[%s220] sm:$0xff]
        %v264 = vld [vmem:[%s220 + $0x8] sm:$0xff]
        %v265 = vld [vmem:[%s229] sm:$0x1]
        %v267 = vperm.slane %v265, 0
        %vm269 = vcmask 130048
        %v271 = vsel %vm269, %v262, 0
        %273 = vmatpush.msra.mxu0 0.0
        %274 = vmatpush.msra.mxu0 0.0
        %275 = vmatpush.msra.mxu0 0.0
        %276 = vmatpush.msra.mxu0 0.0
        %277 = vmatpush.msra.mxu0 0.0
        %278 = vmatpush.msra.mxu0 0.0
        %279 = vmatpush.msra.mxu0 0.0
        %280 = vmatpush.msra.mxu0 0.0
        %281 = vmatpush.msra.mxu0 0.0
        %282 = vmatpush.msra.mxu0 0.0
        %283 = vmatpush.msra.mxu0 0.0
        %284 = vmatpush.msra.mxu0 0.0
        %285 = vmatpush.msra.mxu0 0.0
        %286 = vmatpush.msra.mxu0 0.0
        %287 = vmatpush.msra.mxu0 %v264
        %288 = vmatpush.msra.mxu0 %v263
        %289 = vmatmul.f32.gmra.mxu0 %v271
        %v290 = vpop.f32.mrf.mxu0
        %v291 = vadd.f32 %v267, %v290
        %292 = vdwg.mxu0
        %v293 = vmax.f32 %v291, 0.0
        %vm294 = vcmask 125952
        %295 = vst.msk [vmem:[%s261] sm:$0xf] %vm294, %v293
        %s296 = sand.u32 %s109, 1
        %s297 = scalar_lea.sflag [#allocation4], %s296
        %s298 = sand.u32 %s109, 1
        %s299 = smul.addr %s298, 4
        %s300 = scalar_lea.vmem [#allocation8], %s299
        // Predicated region
        $region45: #{tpu_custom_call.1} parent=31 // pred_check
          %p301 = pneg %p119
        $region46: #{tpu_custom_call.1} parent=31 // pred_check_branch
          %303 = sbr.rel (%p301) target = $region48
        $region47: #{tpu_custom_call.1} parent=31 // pred_region
          %305 = vsyncadd %s297, 0
          %s306 = smul.addr %s23, 4
          %s307 = scalar_lea.hbm %s3, %s306
          %s309 = sshll.u32 %s300, 4
          %s310 = int_to_ptr.vmem [resolvable:$true] %s309
          %s311 = sshll.u32 %s307, 4
          %s312 = int_to_ptr.hbm [resolvable:$true] %s311
          %314 = dma.vmem_to_hbm [thread:$0]  %s310, 64, %s312, %s297
        $region48: #{tpu_custom_call.1} parent=31 // pred_fallthru
          _
      $region32: #{tpu_custom_call.1} parent=5 // pred_fallthru
        _
      %p315 = scmp.le.s32.totalorder 2, %s18
      // Predicated region
      $region49: #{tpu_custom_call.1} parent=5 // pred_check
        %p316 = pneg %p315
      $region50: #{tpu_custom_call.1} parent=5 // pred_check_branch
        %318 = sbr.rel (%p316) target = $region52
      $region51: #{tpu_custom_call.1} parent=5 // pred_region
        %s319 = ssub.s32 %s18, 2
        // Predicated region
        $region53: #{tpu_custom_call.1} parent=51 // pred_check
          %p320 = pneg %p125
        $region54: #{tpu_custom_call.1} parent=51 // pred_check_branch
          %322 = sbr.rel (%p320) target = $region56
        $region55: #{tpu_custom_call.1} parent=51 // pred_region
          %s323 = sand.u32 %s110, 1
          %s324 = scalar_lea.sflag [#allocation4], %s323
          %s325 = sand.u32 %s110, 1
          %s326 = smul.addr %s325, 4
          %s327 = scalar_lea.vmem [#allocation8], %s326
          %329 = dma.done %s324, 64
        $region56: #{tpu_custom_call.1} parent=51 // pred_fallthru
          _
      $region52: #{tpu_custom_call.1} parent=5 // pred_fallthru
        _
    $region6: #{tpu_custom_call.1} parent=1 // loop_footer
      %s22 = sadd.s32 1, %s18
    $region7: #{tpu_custom_call.1} parent=1 // loop_footer_branch
      %17 = sbr.rel target = $region3
    $region8: #{tpu_custom_call.1} parent=1 // loop_exit
      _
    %330 = vsyncpa [#allocation3], 1
    %s331 = scalar_lea.sflag [#allocation3], 1
    %332 = vsyncpa %s331, 1
    %333 = vsyncpa [#allocation6], 1
    %s334 = scalar_lea.sflag [#allocation6], 1
    %335 = vsyncpa %s334, 1
    %336 = vsyncpa [#allocation4], 1
    %s337 = scalar_lea.sflag [#allocation4], 1
    %338 = vsyncpa %s337, 1

</llo_original>
